<compile_context>
chip_gen: v7x
topology: tpu7x:2x2x1
jax: 0.10.0
libtpu: 0.0.40
codegen_flags: <defaults>
</compile_context>

<pallas_src>
import math
from functools import partial

import jax
import jax.numpy as jnp
from jax.experimental import pallas as pl
from jax.experimental.pallas import tpu as pltpu


# ----------------------------- module parameters -----------------------------

MAX_RES = 15.0
MIN_RES = 15.0 / 2000.0
DIV_FACTOR = 4

N_FREQUENCIES = int(math.log(MAX_RES / MIN_RES, DIV_FACTOR)) + 1  # = 6
EMB_DIM = 2 * N_FREQUENCIES                                       # = 12
_PAD_DIM = 16          # EMB_DIM rounded up to a sublane multiple (safe transpose)

_FREQS = tuple(
    2.0 * math.pi * (DIV_FACTOR ** k) / MAX_RES for k in range(N_FREQUENCIES)
)

_CHUNK = 256           # inner relayout chunk (points); multiple of 128


# -------------------------------- Pallas kernel -------------------------------

def _sinusoids_kernel(freqs_ref, x_ref, out_ref):
    # freqs_ref: (6, 1)    f32
    # x_ref:     (1, TN)   f32  -- points on the lane axis (lane-dense compute)
    # out_ref:   (TN, 12)  f32  -- module output layout
    tn = x_ref.shape[1]
    n_chunks = tn // _CHUNK                                       # static

    # Hoisted loop invariants (broadcasts are not CSE'd by JAX).
    fb = jnp.broadcast_to(freqs_ref[...], (N_FREQUENCIES, _CHUNK))        # (6, CHUNK)
    zpad = jnp.zeros((_PAD_DIM - EMB_DIM, _CHUNK), dtype=jnp.float32)     # (4, CHUNK)

    def body(c, carry):
        off = pl.multiple_of(c * _CHUNK, _CHUNK)
        x = x_ref[:, pl.ds(off, _CHUNK)]                          # (1, CHUNK)
        emb = jnp.sqrt(x + 1e-8) * fb                             # (6, CHUNK), lane-dense
        # rows 0..5 = sin, rows 6..11 = cos, rows 12..15 = padding
        val = jnp.concatenate([jnp.sin(emb), jnp.cos(emb), zpad], axis=0)  # (16, CHUNK)
        t = jnp.transpose(val, (1, 0))                            # (CHUNK, 16) via XLU
        # Single assignment of the whole 12-feature row block for this chunk.
        out_ref[pl.ds(off, _CHUNK), :] = t[:, :EMB_DIM]
        return carry

    jax.lax.fori_loop(0, n_chunks, body, None)


# ----------------------------------- wrapper ----------------------------------

def _round_up(v: int, m: int) -> int:
    return ((v + m - 1) // m) * m


@partial(jax.jit, static_argnames=("tn_max", "target_steps"))
def sinusoids_embedding(x: jax.Array, *, tn_max: int = 16384,
                        target_steps: int = 8) -> jax.Array:
    """x: (..., 1) -> (..., 2 * n_frequencies) float32, matching the module."""
    *lead, last = x.shape
    assert last == 1, "SinusoidsEmbedding expects a trailing dim of 1"
    n = math.prod(lead) if lead else 1

    # Free row-major relayout: (..., 1) -> (1, N); no pad, no extra HBM pass.
    x_row = x.reshape(1, n).astype(jnp.float32)

    # Lane tile: multiple of the inner chunk, big enough to amortize the
    # ~0.35us/step overhead, small enough to stay well inside scoped VMEM,
    # and aiming for >= target_steps grid steps so both v7x TensorCores work.
    tn_max = max(_CHUNK, (tn_max // _CHUNK) * _CHUNK)
    tn = min(tn_max, max(_CHUNK, _round_up(pl.cdiv(n, target_steps), _CHUNK)))
    grid = (pl.cdiv(n, tn),)

    freqs = jnp.asarray(_FREQS, dtype=jnp.float32).reshape(N_FREQUENCIES, 1)

    out = pl.pallas_call(
        _sinusoids_kernel,
        out_shape=jax.ShapeDtypeStruct((n, EMB_DIM), jnp.float32),
        grid=grid,
        in_specs=[
            pl.BlockSpec((N_FREQUENCIES, 1), lambda i: (0, 0)),   # frequencies
            pl.BlockSpec((1, tn), lambda i: (0, i)),              # points (lanes)
        ],
        out_specs=pl.BlockSpec((tn, EMB_DIM), lambda i: (i, 0)),
        compiler_params=pltpu.CompilerParams(
            dimension_semantics=("parallel",),
            vmem_limit_bytes=32 * 1024 * 1024,                    # v7x-safe
        ),
    )(freqs, x_row)

    return out.reshape(*lead, EMB_DIM) if lead else out.reshape(EMB_DIM)


# ------------------------------- reference check ------------------------------

def sinusoids_embedding_ref(x: jax.Array) -> jax.Array:
    freqs = jnp.asarray(_FREQS, dtype=jnp.float32).reshape(1, N_FREQUENCIES)
    xs = jnp.sqrt(x.astype(jnp.float32) + 1e-8)
    emb = xs * freqs
    return jnp.concatenate([jnp.sin(emb), jnp.cos(emb)], axis=-1)


if __name__ == "__main__":
    # Phases reach ~1.7e3 rad; allow small differences between the in-kernel
    # (Mosaic) and XLA transcendental expansions.
    TOL = dict(atol=2e-4, rtol=2e-4)

    # Small shape consistent with the module: 8 scalar points in [0, 15].
    x_small = jax.random.uniform(jax.random.PRNGKey(0), (8, 1),
                                 dtype=jnp.float32, minval=0.0, maxval=15.0)
    out_small = jax.block_until_ready(sinusoids_embedding(x_small))
    assert out_small.shape == (8, EMB_DIM), out_small.shape
    assert jnp.allclose(out_small, sinusoids_embedding_ref(x_small), **TOL), \
        "mismatch vs reference (small)"

    # Multi-step grid + non-divisible N (masked partial last block).
    x_big = jax.random.uniform(jax.random.PRNGKey(1), (1000, 1),
                               dtype=jnp.float32, minval=0.0, maxval=15.0)
    out_big = jax.block_until_ready(sinusoids_embedding(x_big, tn_max=512))
    assert out_big.shape == (1000, EMB_DIM), out_big.shape
    assert jnp.allclose(out_big, sinusoids_embedding_ref(x_big), **TOL), \
        "mismatch vs reference (non-divisible)"

    # Exactly divisible multi-step path with default tiling.
    x_mid = jax.random.uniform(jax.random.PRNGKey(2), (4096, 1),
                               dtype=jnp.float32, minval=0.0, maxval=15.0)
    out_mid = jax.block_until_ready(sinusoids_embedding(x_mid))
    assert out_mid.shape == (4096, EMB_DIM), out_mid.shape
    assert jnp.allclose(out_mid, sinusoids_embedding_ref(x_mid), **TOL), \
        "mismatch vs reference (divisible)"

    print("KERNEL_OK")
</pallas_src>

<mosaic_0001>
module attributes {stable_mosaic.version = 11 : i64} {
  func.func @_sinusoids_kernel(%arg0: i32, %arg1: memref<6x1xf32, #tpu.memory_space<vmem>>, %arg2: memref<1x256xf32, #tpu.memory_space<vmem>>, %arg3: memref<256x12xf32, #tpu.memory_space<vmem>>) attributes {dimension_semantics = [#tpu.dimension_semantics<parallel>], iteration_bounds = array<i64: 1>, scalar_prefetch = 0 : i64, scratch_operands = 0 : i64, tpu.core_type = #tpu.core_type<tc>, window_params = [{pipeline_mode = #tpu.pipeline_mode<synchronous>, transform_indices = @transform_0, window_bounds = array<i64: 6, 1>}, {transform_indices = @transform_1, window_bounds = array<i64: 1, 256>}, {transform_indices = @transform_2, window_bounds = array<i64: 256, 12>}]} {
    %c0 = arith.constant 0 : index
    %c0_0 = arith.constant 0 : index
    %0 = vector.load %arg1[%c0, %c0_0] : memref<6x1xf32, #tpu.memory_space<vmem>>, vector<6x1xf32>
    %1 = vector.shape_cast %0 : vector<6x1xf32> to vector<6x1xf32>
    %2 = vector.broadcast %1 : vector<6x1xf32> to vector<6x256xf32>
    %cst = arith.constant 0.000000e+00 : f32
    %3 = vector.broadcast %cst : f32 to vector<4x256xf32>
    %c0_i32 = arith.constant 0 : i32
    %c256_i32 = arith.constant 256 : i32
    %4 = arith.muli %c0_i32, %c256_i32 : i32
    %5 = tpu.assume_multiple %4, 256 : i32
    %c0_1 = arith.constant 0 : index
    %6 = arith.index_cast %5 : i32 to index
    %7 = vector.load %arg2[%c0_1, %6] : memref<1x256xf32, #tpu.memory_space<vmem>>, vector<1x256xf32>
    %cst_2 = arith.constant 9.99999993E-9 : f32
    %8 = vector.broadcast %cst_2 : f32 to vector<1x256xf32>
    %9 = arith.addf %7, %8 : vector<1x256xf32>
    %10 = math.sqrt %9 : vector<1x256xf32>
    %11 = vector.broadcast %10 : vector<1x256xf32> to vector<6x256xf32>
    %12 = arith.mulf %11, %2 : vector<6x256xf32>
    %13 = math.sin %12 : vector<6x256xf32>
    %14 = math.cos %12 : vector<6x256xf32>
    %15 = tpu.concatenate %13, %14, %3 in 0 : vector<6x256xf32>, vector<6x256xf32>, vector<4x256xf32> -> vector<16x256xf32>
    %16 = tpu.transpose %15, [1, 0] : vector<16x256xf32> -> vector<256x16xf32>
    %17 = vector.extract_strided_slice %16 {offsets = [0, 0], sizes = [256, 12], strides = [1, 1]} : vector<256x16xf32> to vector<256x12xf32>
    %18 = arith.index_cast %5 : i32 to index
    %c0_3 = arith.constant 0 : index
    %19 = vector.load %arg3[%18, %c0_3] : memref<256x12xf32, #tpu.memory_space<vmem>>, vector<256x12xf32>
    tpu.vector_store %arg3[%18, %c0_3], %17 {strides = array<i32>} : memref<256x12xf32, #tpu.memory_space<vmem>>, vector<256x12xf32>,
    %c1_i32 = arith.constant 1 : i32
    return
  }
  func.func @transform_0(%arg0: i32) -> (i32, i32) {
    %c0_i32 = arith.constant 0 : i32
    %c0_i32_0 = arith.constant 0 : i32
    %c0_i32_1 = arith.constant 0 : i32
    return %c0_i32, %c0_i32_0 : i32, i32
  }
  func.func @transform_1(%arg0: i32) -> (i32, i32) {
    %c0_i32 = arith.constant 0 : i32
    %c0_i32_0 = arith.constant 0 : i32
    return %c0_i32, %arg0 : i32, i32
  }
  func.func @transform_2(%arg0: i32) -> (i32, i32) {
    %c0_i32 = arith.constant 0 : i32
    %c0_i32_0 = arith.constant 0 : i32
    return %arg0, %c0_i32 : i32, i32
  }
}

</mosaic_0001>

<llo_original>
// kernel: sinusoids_embedding.1
$region0: #{sinusoids_embedding.1}
  #allocation0 [shape = 'u32[]', space=smem, size = 0x4, offset = 0x4, fixed_abs, tag = 'smem constant byte address 0x4 - core index']
  #allocation1 [shape = 'u32[144,128]{1,0:T(1,128)}', space=vmem, size = 0x12000, scoped, tag = 'internal scratch']
  %s0 = inlined_call_operand.hbm [shape: f32[6,1], index: 0, kind: input, shape index: {}]
  %s1 = inlined_call_operand.vmem [shape: f32[1,8], index: 1, kind: input, shape index: {}]
  %s2 = inlined_call_operand.hbm [shape: f32[8,12], index: 2, kind: output, shape index: {}]
  %s3 = sld [smem:[#allocation0]]
  $region22: #{sinusoids_embedding.1} parent=0
    _
  %s5 = ssub.s32 1, %s3
  %s6 = scalar_select 0, %s5, %s3
  $region1: #{sinusoids_embedding.1} parent=0
    #allocation2 [shape = 'u8[4096]{0}', space=vmem, size = 0x1000, scoped, tag = 'input window, operand 0, single buffered']
    #allocation3 [shape = 's32[1]{0}', space=sflag, size = 0x4, scoped, tag = 'scoped memory for sinusoids_embedding.1']
    #allocation4 [shape = 's32[1]{0}', space=sflag, size = 0x4, scoped, tag = 'scoped memory for sinusoids_embedding.1']
    #allocation5 [shape = 'u8[131072]{0}', space=vmem, size = 0x20000, scoped, tag = 'output window, operand 0, single buffered']
    %7 = vsyncpa [#allocation3], 0
    %8 = vsyncpa [#allocation4], 0
    // Predicated region
    $region2: #{sinusoids_embedding.1} parent=1 // pred_check
      _
    $region3: #{sinusoids_embedding.1} parent=1 // pred_check_branch
      %10 = sbr.rel (0) target = $region5
    $region4: #{sinusoids_embedding.1} parent=1 // pred_region
      %s12 = ssub.s32 128, 128
      %13 = vsyncadd [#allocation3], %s12
      %s15 = sshll.u32 [#allocation2], 4
      %s16 = int_to_ptr.vmem [resolvable:$true] %s15
      %18 = dma.hbm_to_vmem [thread:$0]  %s0, 128, %s16, [#allocation3]
    $region5: #{sinusoids_embedding.1} parent=1 // pred_fallthru
      _
    // Predicated region
    $region6: #{sinusoids_embedding.1} parent=1 // pred_check
      _
    $region7: #{sinusoids_embedding.1} parent=1 // pred_check_branch
      %20 = sbr.rel (0) target = $region9
    $region8: #{sinusoids_embedding.1} parent=1 // pred_region
      _
    $region9: #{sinusoids_embedding.1} parent=1 // pred_fallthru
      _
    // Predicated region
    $region10: #{sinusoids_embedding.1} parent=1 // pred_check
      _
    $region11: #{sinusoids_embedding.1} parent=1 // pred_check_branch
      %22 = sbr.rel (0) target = $region13
    $region12: #{sinusoids_embedding.1} parent=1 // pred_region
      %23 = dma.done [#allocation3], 128
    $region13: #{sinusoids_embedding.1} parent=1 // pred_fallthru
      _
    %v24 = vld [vmem:[#allocation2] sm:$0x3f]
    %26 = vset.pattern.permute.xlu0 0
    %27 = vperm.xlu0 %26, %v24
    %v28 = vpop.permute.xlu0 %27
    %v30 = vld [vmem:[%s1] sm:$0x3]
    %v31 = vadd.f32 %v30, 1e-08
    %v32 = vrsqrt.pop %v31
    %v33 = vmul.f32 %v31, %v32
    %vm34 = vcmp.eq.f32.partialorder %v31, inf
    %v35 = vsel %vm34, %v31, %v33
    %vm36 = vcmp.eq.f32.partialorder %v31, 0.0
    %v37 = vand.u32 %v31, 2147483648
    %v38 = vsel %vm36, %v37, %v35
    %v40 = vlaneseq
    %v41 = vshrl.u32 %v40, 7
    %v42 = vsub.s32 0, %v41
    %v43 = vrot.slane %v38, %v42
    %v44 = vlaneseq
    %v45 = vshrl.u32 %v44, 7
    %v46 = vsub.s32 1, %v45
    %v47 = vrot.slane %v38, %v46
    %v50 = vmul.f32 %v43, %v28
    %v51 = vmul.f32 %v47, %v28
    %v52 = vand.u32 2147483647, %v50
    %vm53 = vcmp.le.f32.partialorder %v52, 0.7853982
    %vm54 = vcmp.lt.s32.totalorder %v50, 0
    %v55 = vand.u32 %v50, 2139095040
    %v56 = vshrl.u32 %v55, 23
    %v57 = vsub.s32 %v56, 127
    %v58 = vand.u32 2147483647, %v50
    %v59 = vand.u32 %v58, 8388607
    %v60 = vor.u32 %v59, 8388608
    %v61 = vsub.s32 0, %v60
    %v62 = vadd.s32 %v57, 1
    %vm63 = vcmp.gt.s32.totalorder %v62, 0
    %v64 = vsel %vm63, %v62, 0
    %v65 = vshrl.u32 %v64, 5
    %v66 = vand.u32 %v64, 31
    %v67 = vsub.s32 32, %v66
    %v68 = vshrl.u32 683565275, %v67
    %v69 = vshll.u32 683565275, %v66
    %v70 = vshrl.u32 2475754826, %v67
    %v71 = vor.u32 %v69, %v70
    %v72 = vshll.u32 2475754826, %v66
    %v73 = vshrl.u32 2131351028, %v67
    %v74 = vor.u32 %v72, %v73
    %v75 = vshll.u32 2131351028, %v66
    %v76 = vshrl.u32 2102212464, %v67
    %v77 = vor.u32 %v75, %v76
    %v78 = vshll.u32 2102212464, %v66
    %v79 = vshrl.u32 920167782, %v67
    %v80 = vor.u32 %v78, %v79
    %v81 = vshll.u32 920167782, %v66
    %v82 = vshrl.u32 1326507024, %v67
    %v83 = vor.u32 %v81, %v82
    %vm84 = vcmp.lt.s32.totalorder %v65, 1
    %vm85 = vcmp.lt.s32.totalorder %v65, 2
    %vm86 = vcmp.lt.s32.totalorder %v65, 3
    %vm87 = vcmp.lt.s32.totalorder %v65, 4
    %v88 = vsel %vm84, %v68, %v71
    %v89 = vsel %vm87, %v77, 2102212464
    %v90 = vsel %vm86, %v74, %v89
    %v91 = vsel %vm85, %v88, %v90
    %v92 = vsel %vm84, %v71, %v74
    %v93 = vsel %vm87, %v80, 920167782
    %v94 = vsel %vm86, %v77, %v93
    %v95 = vsel %vm85, %v92, %v94
    %v96 = vsel %vm84, %v74, %v77
    %v97 = vsel %vm87, %v83, 1326507024
    %v98 = vsel %vm86, %v80, %v97
    %v99 = vsel %vm85, %v96, %v98
    %v100 = vshll.u32 %v60, 8
    %v101 = vmul.u32.u64.compose %v100, %v99
    %v102 = vextract.low.u32 %v101
    %v103 = vextract.high.u32 %v101
    %v104 = vmul.u32.u64.compose %v100, %v95
    %v105 = vextract.low.u32 %v104
    %v106 = vextract.high.u32 %v104
    %v107 = vmul.u32 %v100, %v91
    %v108 = vadd.s32 %v103, %v105
    %vm109 = vc.u32 %v103, %v105
    %v110 = vadd.s32 %v106, 1
    %v111 = vsel %vm109, %v110, %v106
    %v112 = vadd.s32 %v107, %v111
    %v113 = vadd.s32 %v112, 536870912
    %v114 = vshrl.u32 %v113, 30
    %v115 = vshll.u32 %v114, 30
    %v116 = vsub.s32 %v112, %v115
    %vm117 = vcmp.lt.s32.totalorder %v116, 0
    %v118 = vsub.s32 0, %v116
    %v119 = vsel %vm117, %v118, %v116
    %v120 = vclz %v119
    %v121 = vsub.s32 %v120, 2
    %vm122 = vcmp.gt.s32.totalorder 0, %v121
    %v123 = vsel %vm122, 0, %v121
    %v124 = vsub.s32 32, %v123
    %v125 = vshll.u32 %v116, %v123
    %v126 = vshrl.u32 %v108, %v124
    %v127 = vor.u32 %v125, %v126
    %v128 = vsub.s32 4294967266, %v123
    %v129 = vadd.s32 %v128, 127
    %v130 = vshll.u32 %v129, 23
    %v131 = vor.u32 4788187, %v130
    %v132 = vand.u32 2147483647, %v131
    %v134 = vcvt.s32.f32 %v127
    %v135 = vmul.f32 %v134, %v132
    %v136 = vxor.u32 %v135, 2147483648
    %v137 = vsel %vm54, %v136, %v135
    %v138 = vsub.s32 4, %v114
    %v139 = vsel %vm54, %v138, %v114
    %v140 = vsel %vm53, %v50, %v137
    %v141 = vsel %vm53, 0, %v139
    %v142 = vcosq.f32.pop %v140
    %v143 = vsinq.f32.pop %v140
    %vm144 = vweird.f32 %v50
    %v145 = vadd.s32 %v141, 3
    %v146 = vand.u32 %v145, 3
    %vm147 = vcmp.lt.s32.totalorder %v146, 2
    %vm148 = vcmp.eq.s32.totalorder %v146, 0
    %v149 = vxor.u32 %v143, 2147483648
    %v150 = vsel %vm148, %v142, %v149
    %vm151 = vcmp.eq.s32.totalorder %v146, 2
    %v152 = vxor.u32 %v142, 2147483648
    %v153 = vsel %vm151, %v152, %v143
    %v154 = vsel %vm147, %v150, %v153
    %v155 = vsel %vm144, nan, %v154
    %v156 = vand.u32 2147483647, %v51
    %vm157 = vcmp.le.f32.partialorder %v156, 0.7853982
    %vm158 = vcmp.lt.s32.totalorder %v51, 0
    %v159 = vand.u32 %v51, 2139095040
    %v160 = vshrl.u32 %v159, 23
    %v161 = vsub.s32 %v160, 127
    %v162 = vand.u32 2147483647, %v51
    %v163 = vand.u32 %v162, 8388607
    %v164 = vor.u32 %v163, 8388608
    %v165 = vsub.s32 0, %v164
    %v166 = vadd.s32 %v161, 1
    %vm167 = vcmp.gt.s32.totalorder %v166, 0
    %v168 = vsel %vm167, %v166, 0
    %v169 = vshrl.u32 %v168, 5
    %v170 = vand.u32 %v168, 31
    %v171 = vsub.s32 32, %v170
    %v172 = vshrl.u32 683565275, %v171
    %v173 = vshll.u32 683565275, %v170
    %v174 = vshrl.u32 2475754826, %v171
    %v175 = vor.u32 %v173, %v174
    %v176 = vshll.u32 2475754826, %v170
    %v177 = vshrl.u32 2131351028, %v171
    %v178 = vor.u32 %v176, %v177
    %v179 = vshll.u32 2131351028, %v170
    %v180 = vshrl.u32 2102212464, %v171
    %v181 = vor.u32 %v179, %v180
    %v182 = vshll.u32 2102212464, %v170
    %v183 = vshrl.u32 920167782, %v171
    %v184 = vor.u32 %v182, %v183
    %v185 = vshll.u32 920167782, %v170
    %v186 = vshrl.u32 1326507024, %v171
    %v187 = vor.u32 %v185, %v186
    %vm188 = vcmp.lt.s32.totalorder %v169, 1
    %vm189 = vcmp.lt.s32.totalorder %v169, 2
    %vm190 = vcmp.lt.s32.totalorder %v169, 3
    %vm191 = vcmp.lt.s32.totalorder %v169, 4
    %v192 = vsel %vm188, %v172, %v175
    %v193 = vsel %vm191, %v181, 2102212464
    %v194 = vsel %vm190, %v178, %v193
    %v195 = vsel %vm189, %v192, %v194
    %v196 = vsel %vm188, %v175, %v178
    %v197 = vsel %vm191, %v184, 920167782
    %v198 = vsel %vm190, %v181, %v197
    %v199 = vsel %vm189, %v196, %v198
    %v200 = vsel %vm188, %v178, %v181
    %v201 = vsel %vm191, %v187, 1326507024
    %v202 = vsel %vm190, %v184, %v201
    %v203 = vsel %vm189, %v200, %v202
    %v204 = vshll.u32 %v164, 8
    %v205 = vmul.u32.u64.compose %v204, %v203
    %v206 = vextract.low.u32 %v205
    %v207 = vextract.high.u32 %v205
    %v208 = vmul.u32.u64.compose %v204, %v199
    %v209 = vextract.low.u32 %v208
    %v210 = vextract.high.u32 %v208
    %v211 = vmul.u32 %v204, %v195
    %v212 = vadd.s32 %v207, %v209
    %vm213 = vc.u32 %v207, %v209
    %v214 = vadd.s32 %v210, 1
    %v215 = vsel %vm213, %v214, %v210
    %v216 = vadd.s32 %v211, %v215
    %v217 = vadd.s32 %v216, 536870912
    %v218 = vshrl.u32 %v217, 30
    %v219 = vshll.u32 %v218, 30
    %v220 = vsub.s32 %v216, %v219
    %vm221 = vcmp.lt.s32.totalorder %v220, 0
    %v222 = vsub.s32 0, %v220
    %v223 = vsel %vm221, %v222, %v220
    %v224 = vclz %v223
    %v225 = vsub.s32 %v224, 2
    %vm226 = vcmp.gt.s32.totalorder 0, %v225
    %v227 = vsel %vm226, 0, %v225
    %v228 = vsub.s32 32, %v227
    %v229 = vshll.u32 %v220, %v227
    %v230 = vshrl.u32 %v212, %v228
    %v231 = vor.u32 %v229, %v230
    %v232 = vsub.s32 4294967266, %v227
    %v233 = vadd.s32 %v232, 127
    %v234 = vshll.u32 %v233, 23
    %v235 = vor.u32 4788187, %v234
    %v236 = vand.u32 2147483647, %v235
    %v238 = vcvt.s32.f32 %v231
    %v239 = vmul.f32 %v238, %v236
    %v240 = vxor.u32 %v239, 2147483648
    %v241 = vsel %vm158, %v240, %v239
    %v242 = vsub.s32 4, %v218
    %v243 = vsel %vm158, %v242, %v218
    %v244 = vsel %vm157, %v51, %v241
    %v245 = vsel %vm157, 0, %v243
    %v246 = vcosq.f32.pop %v244
    %v247 = vsinq.f32.pop %v244
    %vm248 = vweird.f32 %v51
    %v249 = vadd.s32 %v245, 3
    %v250 = vand.u32 %v249, 3
    %vm251 = vcmp.lt.s32.totalorder %v250, 2
    %vm252 = vcmp.eq.s32.totalorder %v250, 0
    %v253 = vxor.u32 %v247, 2147483648
    %v254 = vsel %vm252, %v246, %v253
    %vm255 = vcmp.eq.s32.totalorder %v250, 2
    %v256 = vxor.u32 %v246, 2147483648
    %v257 = vsel %vm255, %v256, %v247
    %v258 = vsel %vm251, %v254, %v257
    %v259 = vsel %vm248, nan, %v258
    %v260 = vand.u32 2147483647, %v50
    %vm261 = vcmp.le.f32.partialorder %v260, 0.7853982
    %vm262 = vcmp.lt.s32.totalorder %v50, 0
    %v263 = vand.u32 %v50, 2139095040
    %v264 = vshrl.u32 %v263, 23
    %v265 = vsub.s32 %v264, 127
    %v266 = vand.u32 2147483647, %v50
    %v267 = vand.u32 %v266, 8388607
    %v268 = vor.u32 %v267, 8388608
    %v269 = vsub.s32 0, %v268
    %v270 = vadd.s32 %v265, 1
    %vm271 = vcmp.gt.s32.totalorder %v270, 0
    %v272 = vsel %vm271, %v270, 0
    %v273 = vshrl.u32 %v272, 5
    %v274 = vand.u32 %v272, 31
    %v275 = vsub.s32 32, %v274
    %v276 = vshrl.u32 683565275, %v275
    %v277 = vshll.u32 683565275, %v274
    %v278 = vshrl.u32 2475754826, %v275
    %v279 = vor.u32 %v277, %v278
    %v280 = vshll.u32 2475754826, %v274
    %v281 = vshrl.u32 2131351028, %v275
    %v282 = vor.u32 %v280, %v281
    %v283 = vshll.u32 2131351028, %v274
    %v284 = vshrl.u32 2102212464, %v275
    %v285 = vor.u32 %v283, %v284
    %v286 = vshll.u32 2102212464, %v274
    %v287 = vshrl.u32 920167782, %v275
    %v288 = vor.u32 %v286, %v287
    %v289 = vshll.u32 920167782, %v274
    %v290 = vshrl.u32 1326507024, %v275
    %v291 = vor.u32 %v289, %v290
    %vm292 = vcmp.lt.s32.totalorder %v273, 1
    %vm293 = vcmp.lt.s32.totalorder %v273, 2
    %vm294 = vcmp.lt.s32.totalorder %v273, 3
    %vm295 = vcmp.lt.s32.totalorder %v273, 4
    %v296 = vsel %vm292, %v276, %v279
    %v297 = vsel %vm295, %v285, 2102212464
    %v298 = vsel %vm294, %v282, %v297
    %v299 = vsel %vm293, %v296, %v298
    %v300 = vsel %vm292, %v279, %v282
    %v301 = vsel %vm295, %v288, 920167782
    %v302 = vsel %vm294, %v285, %v301
    %v303 = vsel %vm293, %v300, %v302
    %v304 = vsel %vm292, %v282, %v285
    %v305 = vsel %vm295, %v291, 1326507024
    %v306 = vsel %vm294, %v288, %v305
    %v307 = vsel %vm293, %v304, %v306
    %v308 = vshll.u32 %v268, 8
    %v309 = vmul.u32.u64.compose %v308, %v307
    %v310 = vextract.low.u32 %v309
    %v311 = vextract.high.u32 %v309
    %v312 = vmul.u32.u64.compose %v308, %v303
    %v313 = vextract.low.u32 %v312
    %v314 = vextract.high.u32 %v312
    %v315 = vmul.u32 %v308, %v299
    %v316 = vadd.s32 %v311, %v313
    %vm317 = vc.u32 %v311, %v313
    %v318 = vadd.s32 %v314, 1
    %v319 = vsel %vm317, %v318, %v314
    %v320 = vadd.s32 %v315, %v319
    %v321 = vadd.s32 %v320, 536870912
    %v322 = vshrl.u32 %v321, 30
    %v323 = vshll.u32 %v322, 30
    %v324 = vsub.s32 %v320, %v323
    %vm325 = vcmp.lt.s32.totalorder %v324, 0
    %v326 = vsub.s32 0, %v324
    %v327 = vsel %vm325, %v326, %v324
    %v328 = vclz %v327
    %v329 = vsub.s32 %v328, 2
    %vm330 = vcmp.gt.s32.totalorder 0, %v329
    %v331 = vsel %vm330, 0, %v329
    %v332 = vsub.s32 32, %v331
    %v333 = vshll.u32 %v324, %v331
    %v334 = vshrl.u32 %v316, %v332
    %v335 = vor.u32 %v333, %v334
    %v336 = vsub.s32 4294967266, %v331
    %v337 = vadd.s32 %v336, 127
    %v338 = vshll.u32 %v337, 23
    %v339 = vor.u32 4788187, %v338
    %v340 = vand.u32 2147483647, %v339
    %v342 = vcvt.s32.f32 %v335
    %v343 = vmul.f32 %v342, %v340
    %v344 = vxor.u32 %v343, 2147483648
    %v345 = vsel %vm262, %v344, %v343
    %v346 = vsub.s32 4, %v322
    %v347 = vsel %vm262, %v346, %v322
    %v348 = vsel %vm261, %v50, %v345
    %v349 = vsel %vm261, 0, %v347
    %v350 = vcosq.f32.pop %v348
    %v351 = vsinq.f32.pop %v348
    %vm352 = vweird.f32 %v50
    %v353 = vand.u32 %v349, 3
    %vm354 = vcmp.lt.s32.totalorder %v353, 2
    %vm355 = vcmp.eq.s32.totalorder %v353, 0
    %v356 = vxor.u32 %v351, 2147483648
    %v357 = vsel %vm355, %v350, %v356
    %vm358 = vcmp.eq.s32.totalorder %v353, 2
    %v359 = vxor.u32 %v350, 2147483648
    %v360 = vsel %vm358, %v359, %v351
    %v361 = vsel %vm354, %v357, %v360
    %v362 = vsel %vm352, nan, %v361
    %v363 = vand.u32 2147483647, %v51
    %vm364 = vcmp.le.f32.partialorder %v363, 0.7853982
    %vm365 = vcmp.lt.s32.totalorder %v51, 0
    %v366 = vand.u32 %v51, 2139095040
    %v367 = vshrl.u32 %v366, 23
    %v368 = vsub.s32 %v367, 127
    %v369 = vand.u32 2147483647, %v51
    %v370 = vand.u32 %v369, 8388607
    %v371 = vor.u32 %v370, 8388608
    %v372 = vsub.s32 0, %v371
    %v373 = vadd.s32 %v368, 1
    %vm374 = vcmp.gt.s32.totalorder %v373, 0
    %v375 = vsel %vm374, %v373, 0
    %v376 = vshrl.u32 %v375, 5
    %v377 = vand.u32 %v375, 31
    %v378 = vsub.s32 32, %v377
    %v379 = vshrl.u32 683565275, %v378
    %v380 = vshll.u32 683565275, %v377
    %v381 = vshrl.u32 2475754826, %v378
    %v382 = vor.u32 %v380, %v381
    %v383 = vshll.u32 2475754826, %v377
    %v384 = vshrl.u32 2131351028, %v378
    %v385 = vor.u32 %v383, %v384
    %v386 = vshll.u32 2131351028, %v377
    %v387 = vshrl.u32 2102212464, %v378
    %v388 = vor.u32 %v386, %v387
    %v389 = vshll.u32 2102212464, %v377
    %v390 = vshrl.u32 920167782, %v378
    %v391 = vor.u32 %v389, %v390
    %v392 = vshll.u32 920167782, %v377
    %v393 = vshrl.u32 1326507024, %v378
    %v394 = vor.u32 %v392, %v393
    %vm395 = vcmp.lt.s32.totalorder %v376, 1
    %vm396 = vcmp.lt.s32.totalorder %v376, 2
    %vm397 = vcmp.lt.s32.totalorder %v376, 3
    %vm398 = vcmp.lt.s32.totalorder %v376, 4
    %v399 = vsel %vm395, %v379, %v382
    %v400 = vsel %vm398, %v388, 2102212464
    %v401 = vsel %vm397, %v385, %v400
    %v402 = vsel %vm396, %v399, %v401
    %v403 = vsel %vm395, %v382, %v385
    %v404 = vsel %vm398, %v391, 920167782
    %v405 = vsel %vm397, %v388, %v404
    %v406 = vsel %vm396, %v403, %v405
    %v407 = vsel %vm395, %v385, %v388
    %v408 = vsel %vm398, %v394, 1326507024
    %v409 = vsel %vm397, %v391, %v408
    %v410 = vsel %vm396, %v407, %v409
    %v411 = vshll.u32 %v371, 8
    %v412 = vmul.u32.u64.compose %v411, %v410
    %v413 = vextract.low.u32 %v412
    %v414 = vextract.high.u32 %v412
    %v415 = vmul.u32.u64.compose %v411, %v406
    %v416 = vextract.low.u32 %v415
    %v417 = vextract.high.u32 %v415
    %v418 = vmul.u32 %v411, %v402
    %v419 = vadd.s32 %v414, %v416
    %vm420 = vc.u32 %v414, %v416
    %v421 = vadd.s32 %v417, 1
    %v422 = vsel %vm420, %v421, %v417
    %v423 = vadd.s32 %v418, %v422
    %v424 = vadd.s32 %v423, 536870912
    %v425 = vshrl.u32 %v424, 30
    %v426 = vshll.u32 %v425, 30
    %v427 = vsub.s32 %v423, %v426
    %vm428 = vcmp.lt.s32.totalorder %v427, 0
    %v429 = vsub.s32 0, %v427
    %v430 = vsel %vm428, %v429, %v427
    %v431 = vclz %v430
    %v432 = vsub.s32 %v431, 2
    %vm433 = vcmp.gt.s32.totalorder 0, %v432
    %v434 = vsel %vm433, 0, %v432
    %v435 = vsub.s32 32, %v434
    %v436 = vshll.u32 %v427, %v434
    %v437 = vshrl.u32 %v419, %v435
    %v438 = vor.u32 %v436, %v437
    %v439 = vsub.s32 4294967266, %v434
    %v440 = vadd.s32 %v439, 127
    %v441 = vshll.u32 %v440, 23
    %v442 = vor.u32 4788187, %v441
    %v443 = vand.u32 2147483647, %v442
    %v445 = vcvt.s32.f32 %v438
    %v446 = vmul.f32 %v445, %v443
    %v447 = vxor.u32 %v446, 2147483648
    %v448 = vsel %vm365, %v447, %v446
    %v449 = vsub.s32 4, %v425
    %v450 = vsel %vm365, %v449, %v425
    %v451 = vsel %vm364, %v51, %v448
    %v452 = vsel %vm364, 0, %v450
    %v453 = vcosq.f32.pop %v451
    %v454 = vsinq.f32.pop %v451
    %vm455 = vweird.f32 %v51
    %v456 = vand.u32 %v452, 3
    %vm457 = vcmp.lt.s32.totalorder %v456, 2
    %vm458 = vcmp.eq.s32.totalorder %v456, 0
    %v459 = vxor.u32 %v454, 2147483648
    %v460 = vsel %vm458, %v453, %v459
    %vm461 = vcmp.eq.s32.totalorder %v456, 2
    %v462 = vxor.u32 %v453, 2147483648
    %v463 = vsel %vm461, %v462, %v454
    %v464 = vsel %vm457, %v460, %v463
    %v465 = vsel %vm455, nan, %v464
    %v468 = vrot.slane %v362, 2
    %v469 = vrot.slane %v465, 2
    %vm472 = vcmask 1045504
    %v473 = vsel %vm472, %v155, %v468
    %v474 = vsel %vm472, %v259, %v469
    %vm475 = vcmask 1043456
    %v476 = vsel %vm475, %v468, 0.0
    %v477 = vsel %vm475, %v469, 0.0
    %478 = vxpose.xlu0.b32.start [1/16] %v473, 128
    %479 = vxpose.xlu0.b32.cont [2/16] %v476, 128
    %480 = vxpose.xlu0.b32.cont [3/16] 0.0, 128
    %481 = vxpose.xlu0.b32.cont [4/16] 0.0, 128
    %482 = vxpose.xlu0.b32.cont [5/16] 0.0, 128
    %483 = vxpose.xlu0.b32.cont [6/16] 0.0, 128
    %484 = vxpose.xlu0.b32.cont [7/16] 0.0, 128
    %485 = vxpose.xlu0.b32.cont [8/16] 0.0, 128
    %486 = vxpose.xlu0.b32.cont [9/16] 0.0, 128
    %487 = vxpose.xlu0.b32.cont [10/16] 0.0, 128
    %488 = vxpose.xlu0.b32.cont [11/16] 0.0, 128
    %489 = vxpose.xlu0.b32.cont [12/16] 0.0, 128
    %490 = vxpose.xlu0.b32.cont [13/16] 0.0, 128
    %491 = vxpose.xlu0.b32.cont [14/16] 0.0, 128
    %492 = vxpose.xlu0.b32.cont [15/16] 0.0, 128
    %493 = vxpose.xlu0.b32.end [16/16] 0.0, 128
    %v494 = vpop.trf.xlu0
    %v495 = vpop.trf.xlu0
    %v496 = vpop.trf.xlu0
    %v497 = vpop.trf.xlu0
    %v498 = vpop.trf.xlu0
    %v499 = vpop.trf.xlu0
    %v500 = vpop.trf.xlu0
    %v501 = vpop.trf.xlu0
    %v502 = vpop.trf.xlu0
    %v503 = vpop.trf.xlu0
    %v504 = vpop.trf.xlu0
    %v505 = vpop.trf.xlu0
    %v506 = vpop.trf.xlu0
    %v507 = vpop.trf.xlu0
    %v508 = vpop.trf.xlu0
    %v509 = vpop.trf.xlu0
    %510 = vxpose.xlu0.b32.start [1/16] %v474, 128
    %511 = vxpose.xlu0.b32.cont [2/16] %v477, 128
    %512 = vxpose.xlu0.b32.cont [3/16] 0.0, 128
    %513 = vxpose.xlu0.b32.cont [4/16] 0.0, 128
    %514 = vxpose.xlu0.b32.cont [5/16] 0.0, 128
    %515 = vxpose.xlu0.b32.cont [6/16] 0.0, 128
    %516 = vxpose.xlu0.b32.cont [7/16] 0.0, 128
    %517 = vxpose.xlu0.b32.cont [8/16] 0.0, 128
    %518 = vxpose.xlu0.b32.cont [9/16] 0.0, 128
    %519 = vxpose.xlu0.b32.cont [10/16] 0.0, 128
    %520 = vxpose.xlu0.b32.cont [11/16] 0.0, 128
    %521 = vxpose.xlu0.b32.cont [12/16] 0.0, 128
    %522 = vxpose.xlu0.b32.cont [13/16] 0.0, 128
    %523 = vxpose.xlu0.b32.cont [14/16] 0.0, 128
    %524 = vxpose.xlu0.b32.cont [15/16] 0.0, 128
    %525 = vxpose.xlu0.b32.end [16/16] 0.0, 128
    %v526 = vpop.trf.xlu0
    %v527 = vpop.trf.xlu0
    %v528 = vpop.trf.xlu0
    %v529 = vpop.trf.xlu0
    %v530 = vpop.trf.xlu0
    %v531 = vpop.trf.xlu0
    %v532 = vpop.trf.xlu0
    %v533 = vpop.trf.xlu0
    %v534 = vpop.trf.xlu0
    %v535 = vpop.trf.xlu0
    %v536 = vpop.trf.xlu0
    %v537 = vpop.trf.xlu0
    %v538 = vpop.trf.xlu0
    %v539 = vpop.trf.xlu0
    %v540 = vpop.trf.xlu0
    %v541 = vpop.trf.xlu0
    %vm542 = vcmask 97280
    %543 = vst.msk [vmem:[#allocation5] sm:$0xff] %vm542, %v494
    %544 = vst.msk [vmem:[#allocation5 + $0x8] sm:$0xff] %vm542, %v495
    %545 = vst.msk [vmem:[#allocation5 + $0x10] sm:$0xff] %vm542, %v496
    %546 = vst.msk [vmem:[#allocation5 + $0x18] sm:$0xff] %vm542, %v497
    %547 = vst.msk [vmem:[#allocation5 + $0x20] sm:$0xff] %vm542, %v498
    %548 = vst.msk [vmem:[#allocation5 + $0x28] sm:$0xff] %vm542, %v499
    %549 = vst.msk [vmem:[#allocation5 + $0x30] sm:$0xff] %vm542, %v500
    %550 = vst.msk [vmem:[#allocation5 + $0x38] sm:$0xff] %vm542, %v501
    %551 = vst.msk [vmem:[#allocation5 + $0x40] sm:$0xff] %vm542, %v502
    %552 = vst.msk [vmem:[#allocation5 + $0x48] sm:$0xff] %vm542, %v503
    %553 = vst.msk [vmem:[#allocation5 + $0x50] sm:$0xff] %vm542, %v504
    %554 = vst.msk [vmem:[#allocation5 + $0x58] sm:$0xff] %vm542, %v505
    %555 = vst.msk [vmem:[#allocation5 + $0x60] sm:$0xff] %vm542, %v506
    %556 = vst.msk [vmem:[#allocation5 + $0x68] sm:$0xff] %vm542, %v507
    %557 = vst.msk [vmem:[#allocation5 + $0x70] sm:$0xff] %vm542, %v508
    %558 = vst.msk [vmem:[#allocation5 + $0x78] sm:$0xff] %vm542, %v509
    %559 = vst.msk [vmem:[#allocation5 + $0x80] sm:$0xff] %vm542, %v526
    %560 = vst.msk [vmem:[#allocation5 + $0x88] sm:$0xff] %vm542, %v527
    %561 = vst.msk [vmem:[#allocation5 + $0x90] sm:$0xff] %vm542, %v528
    %562 = vst.msk [vmem:[#allocation5 + $0x98] sm:$0xff] %vm542, %v529
    %563 = vst.msk [vmem:[#allocation5 + $0xa0] sm:$0xff] %vm542, %v530
    %564 = vst.msk [vmem:[#allocation5 + $0xa8] sm:$0xff] %vm542, %v531
    %565 = vst.msk [vmem:[#allocation5 + $0xb0] sm:$0xff] %vm542, %v532
    %566 = vst.msk [vmem:[#allocation5 + $0xb8] sm:$0xff] %vm542, %v533
    %567 = vst.msk [vmem:[#allocation5 + $0xc0] sm:$0xff] %vm542, %v534
    %568 = vst.msk [vmem:[#allocation5 + $0xc8] sm:$0xff] %vm542, %v535
    %569 = vst.msk [vmem:[#allocation5 + $0xd0] sm:$0xff] %vm542, %v536
    %570 = vst.msk [vmem:[#allocation5 + $0xd8] sm:$0xff] %vm542, %v537
    %571 = vst.msk [vmem:[#allocation5 + $0xe0] sm:$0xff] %vm542, %v538
    %572 = vst.msk [vmem:[#allocation5 + $0xe8] sm:$0xff] %vm542, %v539
    %573 = vst.msk [vmem:[#allocation5 + $0xf0] sm:$0xff] %vm542, %v540
    %574 = vst.msk [vmem:[#allocation5 + $0xf8] sm:$0xff] %vm542, %v541
    // Predicated region
    $region14: #{sinusoids_embedding.1} parent=1 // pred_check
      _
    $region15: #{sinusoids_embedding.1} parent=1 // pred_check_branch
      %576 = sbr.rel (0) target = $region17
    $region16: #{sinusoids_embedding.1} parent=1 // pred_region
      %s578 = ssub.s32 4096, 128
      %579 = vsyncadd [#allocation4], %s578
      %s580 = sshll.u32 [#allocation5], 4
      %s581 = int_to_ptr.vmem [resolvable:$true] %s580
      %586 = dma.vmem_to_hbm [thread:$0]  %s581, 128, %s2, [#allocation4], 128, 128, 8
    $region17: #{sinusoids_embedding.1} parent=1 // pred_fallthru
      _
    // Predicated region
    $region18: #{sinusoids_embedding.1} parent=1 // pred_check
      _
    $region19: #{sinusoids_embedding.1} parent=1 // pred_check_branch
      %588 = sbr.rel (0) target = $region21
    $region20: #{sinusoids_embedding.1} parent=1 // pred_region
      %589 = dma.done [#allocation4], 4096
    $region21: #{sinusoids_embedding.1} parent=1 // pred_fallthru
      _
    %590 = vsyncpa [#allocation3], 1
    %591 = vsyncpa [#allocation4], 1

</llo_original>
